<compile_context>
chip_gen: v7x
topology: tpu7x:2x2x1
jax: 0.10.0
libtpu: 0.0.40
codegen_flags: <defaults>
</compile_context>

<pallas_src>
import functools
import math

import jax
import jax.numpy as jnp
from jax.experimental import pallas as pl
from jax.experimental.pallas import tpu as pltpu

GN_EPS = 1e-5
NUM_GROUPS = 32
VMEM_LIMIT = 32 * 1024 * 1024


def _round_up(x, m):
    return (x + m - 1) // m * m


def _pick_batch_block(batch):
    for cand in range(min(batch, 8), 0, -1):
        if batch % cand == 0:
            return cand
    return 1


# ----------------------------------------------------------------------------
# In-kernel GroupNorm helpers (all elementwise math in f32)
# ----------------------------------------------------------------------------
def _gn_group_stats(y, b_blk, rows_per_batch, n_valid, a, inv_n):
    """Per-batch group statistics via ONE packed stats matmul.
    y: (b_blk*rows_per_batch, cp) f32; a: (cp, cp) 0/1 group-membership (f32).
    Returns (2*b_blk, cp): rows [0:b_blk] per-channel group mean, rows [b_blk:] E[x^2]."""
    sums, sqs = [], []
    for bi in range(b_blk):
        yb = y[bi * rows_per_batch: bi * rows_per_batch + n_valid, :]
        sums.append(jnp.sum(yb, axis=0, keepdims=True))
        sqs.append(jnp.sum(yb * yb, axis=0, keepdims=True))
    stats = jnp.concatenate(sums + sqs, axis=0)                     # (2*b_blk, cp)
    # 0/1 membership matrix; the exact 1/n factor is applied separately in f32.
    return jnp.dot(stats, a, preferred_element_type=jnp.float32) * inv_n


def _gn_apply(yb, mean, ex2, gamma, beta):
    # TODO(synk): two-pass variance for production (single-pass can cancel badly).
    var = jnp.maximum(ex2 - mean * mean, 0.0)       # clamp: avoid cancellation NaNs
    inv = jax.lax.rsqrt(var + GN_EPS)
    return (yb - mean) * inv * gamma + beta


# ----------------------------------------------------------------------------
# Pallas kernels
# ----------------------------------------------------------------------------
def conv1x1_gn_kernel(x_ref, w_ref, b_ref, g_ref, be_ref, a_ref, o_ref,
                      *, rows_per_batch, inv_n):
    # x_ref: (b_blk*T, Cin) f32 ; w_ref: (Cin, cp) bf16 ; b/g/be: (1, cp) f32
    # a_ref: (cp, cp) f32 0/1   ; o_ref: (b_blk*T, d_model) f32
    rpb = rows_per_batch
    b_blk = x_ref.shape[0] // rpb
    d_model = o_ref.shape[1]
    x = x_ref[...].astype(jnp.bfloat16)                 # in-kernel cast: no extra HBM pass
    y = jnp.dot(x, w_ref[...], preferred_element_type=jnp.float32) + b_ref[...]
    gstats = _gn_group_stats(y, b_blk, rpb, rpb, a_ref[...], inv_n)
    gamma, beta = g_ref[...], be_ref[...]
    for bi in range(b_blk):
        yb = y[bi * rpb:(bi + 1) * rpb, :]
        yn = _gn_apply(yb, gstats[bi:bi + 1, :], gstats[b_blk + bi:b_blk + bi + 1, :],
                       gamma, beta)
        o_ref[pl.ds(bi * rpb, rpb), :] = yn[:, :d_model]


def conv3s2_gn_kernel(xp_ref, w12_ref, w0_ref, b_ref, g_ref, be_ref, a_ref,
                      src_ref, carry_ref, *, np1, n, inv_n):
    # Conv1d(k=3, s=2, p=1) on packed frame pairs.  Per batch element the block holds
    # np1 packed rows, row t = [x[2t], x[2t+1]] (rows beyond the real frames are zero,
    # including the last row — relied on for the roll wrap-around below).
    #   y[t] = W0 @ x[2t-1] + W1 @ x[2t] + W2 @ x[2t+1]
    # taps 1+2: one K=2*Cin matmul of the pairs against [W1; W2]
    # tap 0   : K=Cin matmul of the odd halves, f32 result shifted one row down.
    # xp_ref: (b_blk*np1, 2*Cin) bf16 ; w12_ref: (2*Cin, cp) ; w0_ref: (Cin, cp) bf16
    # src_ref: (b_blk*n, d_model) f32 ; carry_ref: (b_blk*tpad, cp) bf16
    b_blk = xp_ref.shape[0] // np1
    cin = w0_ref.shape[0]
    cp = w0_ref.shape[1]
    d_model = src_ref.shape[1]
    tpad = carry_ref.shape[0] // b_blk

    xp = xp_ref[...]
    y = jnp.dot(xp, w12_ref[...], preferred_element_type=jnp.float32)
    u = jnp.dot(xp[:, cin:], w0_ref[...], preferred_element_type=jnp.float32)
    # shift the tap-0 contribution down one output row; the row rolled into each
    # batch's t=0 slot is a zero pad row, so no masking is needed.
    y = y + pltpu.roll(u, shift=1, axis=0) + b_ref[...]

    gstats = _gn_group_stats(y, b_blk, np1, n, a_ref[...], inv_n)
    gamma, beta = g_ref[...], be_ref[...]
    zeros_tail = jnp.zeros((tpad - n, cp), jnp.float32)             # hoisted out of loop
    for bi in range(b_blk):
        yb = y[bi * np1: bi * np1 + n, :]
        yn = _gn_apply(yb, gstats[bi:bi + 1, :], gstats[b_blk + bi:b_blk + bi + 1, :],
                       gamma, beta)
        # user-facing src (f32, d_model lanes)
        src_ref[pl.ds(bi * n, n), :] = yn[:, :d_model]
        # bf16 carry, already in the next level's padded packed-pair layout
        carry_ref[pl.ds(bi * tpad, tpad), :] = jnp.concatenate(
            [yn, zeros_tail], axis=0).astype(carry_ref.dtype)


# ----------------------------------------------------------------------------
# Wrappers (layout plumbing only; all compute in the kernels)
# ----------------------------------------------------------------------------
def _group_mat(cout, cp, num_groups):
    gids = jnp.arange(cout) // (cout // num_groups)
    same = (gids[:, None] == gids[None, :]).astype(jnp.float32)
    return jnp.pad(same, ((0, cp - cout), (0, cp - cout)))


def _pad_vec(v, cp):
    return jnp.pad(v.astype(jnp.float32), (0, cp - v.shape[0])).reshape(1, cp)


def conv1x1_gn_pallas(x_cl, w, b, gamma, beta, *, cp, d_model, num_groups=NUM_GROUPS):
    """x_cl: (B, T, Cin) f32 channels-last; w: (d_model, Cin, 1).
    Returns (B*T, d_model) f32 (flattened rows, channels-last)."""
    B, T, Cin = x_cl.shape
    Cout = w.shape[0]
    assert Cout == d_model and d_model % num_groups == 0
    b_blk = _pick_batch_block(B)
    grid = (B // b_blk,)
    assert grid[0] == 1 or (b_blk * T) % 8 == 0, "batch block rows must be 8-aligned"

    x2d = x_cl.reshape(B * T, Cin)
    w2 = jnp.pad(w[:, :, 0].T, ((0, 0), (0, cp - Cout))).astype(jnp.bfloat16)
    b2, g2, be2 = _pad_vec(b, cp), _pad_vec(gamma, cp), _pad_vec(beta, cp)
    a = _group_mat(Cout, cp, num_groups)
    inv_n = 1.0 / float(T * (Cout // num_groups))

    kern = functools.partial(conv1x1_gn_kernel, rows_per_batch=T, inv_n=inv_n)
    flops = 2 * B * T * Cin * cp + 2 * (2 * B) * cp * cp
    bytes_accessed = (4 * B * T * Cin + 2 * Cin * cp + 4 * (3 * cp + cp * cp)
                      + 4 * B * T * d_model)
    return pl.pallas_call(
        kern,
        out_shape=jax.ShapeDtypeStruct((B * T, d_model), jnp.float32),
        grid_spec=pltpu.PrefetchScalarGridSpec(
            num_scalar_prefetch=0,
            grid=grid,
            in_specs=[
                pl.BlockSpec((b_blk * T, Cin), lambda i: (i, 0)),
                pl.BlockSpec((Cin, cp), lambda i: (0, 0)),
                pl.BlockSpec((1, cp), lambda i: (0, 0)),
                pl.BlockSpec((1, cp), lambda i: (0, 0)),
                pl.BlockSpec((1, cp), lambda i: (0, 0)),
                pl.BlockSpec((cp, cp), lambda i: (0, 0)),
            ],
            out_specs=pl.BlockSpec((b_blk * T, d_model), lambda i: (i, 0)),
        ),
        compiler_params=pltpu.CompilerParams(
            dimension_semantics=("parallel",), vmem_limit_bytes=VMEM_LIMIT),
        cost_estimate=pl.CostEstimate(flops=int(flops), transcendentals=int(B * cp),
                                      bytes_accessed=int(bytes_accessed)),
    )(x2d, w2, b2, g2, be2, a)


def conv3s2_gn_pallas(xp2d, w, b, gamma, beta, *, batch, n, np1, tpad, cp, d_model,
                      num_groups=NUM_GROUPS):
    """xp2d: (B*np1, 2*Cin) bf16 packed frame pairs (pad rows zero, np1 % 8 == 0);
    w: (d_model, Cin_w, 3) with Cin_w <= Cin.  Conv1d(k=3, s=2, p=1) + GroupNorm(32).
    Returns (src, carry):
      src   (B*n, d_model) f32                   — user-facing output rows
      carry (B*tpad, cp)  bf16, lane-dense, already laid out as the next level's
                                packed pairs (tpad = 2*np1_next, pad rows zeroed)."""
    rows, cin2 = xp2d.shape
    assert rows == batch * np1 and np1 % 8 == 0 and tpad % 16 == 0
    cin = cin2 // 2
    Cout, cin_w, k = w.shape
    assert k == 3 and cin_w <= cin and Cout == d_model and d_model % num_groups == 0
    b_blk = _pick_batch_block(batch)
    grid = (batch // b_blk,)
    assert grid[0] == 1 or (b_blk * n) % 8 == 0, "batch block rows must be 8-aligned"

    wt = jnp.transpose(w, (2, 1, 0))                               # (3, Cin_w, Cout)
    wt = jnp.pad(wt, ((0, 0), (0, cin - cin_w), (0, cp - Cout)))
    w12 = jnp.concatenate([wt[1], wt[2]], axis=0).astype(jnp.bfloat16)   # (2*Cin, cp)
    w0 = wt[0].astype(jnp.bfloat16)                                      # (Cin, cp)
    b2, g2, be2 = _pad_vec(b, cp), _pad_vec(gamma, cp), _pad_vec(beta, cp)
    a = _group_mat(Cout, cp, num_groups)
    inv_n = 1.0 / float(n * (Cout // num_groups))

    kern = functools.partial(conv3s2_gn_kernel, np1=np1, n=n, inv_n=inv_n)
    flops = 2 * batch * np1 * (3 * cin) * cp + 2 * (2 * batch) * cp * cp
    bytes_accessed = (2 * rows * cin2 + 2 * 3 * cin * cp + 4 * (3 * cp + cp * cp)
                      + 4 * batch * n * d_model + 2 * batch * tpad * cp)
    return pl.pallas_call(
        kern,
        out_shape=(jax.ShapeDtypeStruct((batch * n, d_model), jnp.float32),
                   jax.ShapeDtypeStruct((batch * tpad, cp), jnp.bfloat16)),
        grid_spec=pltpu.PrefetchScalarGridSpec(
            num_scalar_prefetch=0,
            grid=grid,
            in_specs=[
                pl.BlockSpec((b_blk * np1, cin2), lambda i: (i, 0)),
                pl.BlockSpec((2 * cin, cp), lambda i: (0, 0)),
                pl.BlockSpec((cin, cp), lambda i: (0, 0)),
                pl.BlockSpec((1, cp), lambda i: (0, 0)),
                pl.BlockSpec((1, cp), lambda i: (0, 0)),
                pl.BlockSpec((1, cp), lambda i: (0, 0)),
                pl.BlockSpec((cp, cp), lambda i: (0, 0)),
            ],
            out_specs=(pl.BlockSpec((b_blk * n, d_model), lambda i: (i, 0)),
                       pl.BlockSpec((b_blk * tpad, cp), lambda i: (i, 0))),
        ),
        compiler_params=pltpu.CompilerParams(
            dimension_semantics=("parallel",), vmem_limit_bytes=VMEM_LIMIT),
        cost_estimate=pl.CostEstimate(flops=int(flops), transcendentals=int(batch * cp),
                                      bytes_accessed=int(bytes_accessed)),
    )(xp2d, w12, w0, b2, g2, be2, a)


# ----------------------------------------------------------------------------
# Plain-JAX glue: sine positional embedding, nearest mask interpolation
# ----------------------------------------------------------------------------
def pos_embed_sine(mask, d_model, temperature=10000.0, scale=2.0 * math.pi):
    # DETR-style 1-D sine embedding; mask True == padding.  Returns (B, d_model, T).
    not_mask = jnp.logical_not(mask)
    x_embed = jnp.cumsum(not_mask.astype(jnp.float32), axis=1)
    x_embed = x_embed / (x_embed[:, -1:] + 1e-6) * scale
    dim_t = jnp.arange(d_model, dtype=jnp.float32)
    dim_t = temperature ** (2.0 * jnp.floor(dim_t / 2.0) / d_model)
    pos_x = x_embed[:, :, None] / dim_t                             # (B, T, d_model)
    pos = jnp.stack([jnp.sin(pos_x[:, :, 0::2]),
                     jnp.cos(pos_x[:, :, 1::2])], axis=3)
    pos = pos.reshape(mask.shape[0], mask.shape[1], d_model)
    return jnp.transpose(pos, (0, 2, 1))


def interp_mask_nearest(mask, new_len):
    # F.interpolate(mode='nearest') on the (B, T) bool mask -> (B, new_len) bool.
    T = mask.shape[1]
    idx = jnp.floor(jnp.arange(new_len) * (T / new_len)).astype(jnp.int32)
    return mask[:, idx]


# ----------------------------------------------------------------------------
# Plain-XLA reference (same bf16 MXU operand precision, f32 accumulation + GN)
# ----------------------------------------------------------------------------
def conv1d_gn_ref(x_ncw, w, b, gamma, beta, *, stride, padding, num_groups=NUM_GROUPS):
    y = jax.lax.conv_general_dilated(
        x_ncw.astype(jnp.bfloat16), w.astype(jnp.bfloat16),
        window_strides=(stride,), padding=[(padding, padding)],
        dimension_numbers=("NCH", "OIH", "NCH"),
        preferred_element_type=jnp.float32)
    y = y + b[None, :, None]
    B, C, T = y.shape
    gs = C // num_groups
    yg = y.reshape(B, num_groups, gs, T)
    mean = yg.mean(axis=(2, 3), keepdims=True)
    var = ((yg - mean) ** 2).mean(axis=(2, 3), keepdims=True)
    yn = ((yg - mean) * jax.lax.rsqrt(var + GN_EPS)).reshape(B, C, T)
    return yn * gamma[None, :, None] + beta[None, :, None]


# ----------------------------------------------------------------------------
# BaseEncoder parameters + forward
# ----------------------------------------------------------------------------
def xavier_uniform(key, shape):
    cout, cin, k = shape
    fan_in, fan_out = cin * k, cout * k
    bound = math.sqrt(6.0 / (fan_in + fan_out))
    return jax.random.uniform(key, shape, jnp.float32, -bound, bound)


def init_params(key, num_feature_levels, vf_dim, d_model):
    # TODO(synk): num_feature_levels == 1 branch (Conv2d 1x1 projection) not implemented.
    params = []
    in_channels = vf_dim
    keys = jax.random.split(key, num_feature_levels)
    params.append(dict(w=xavier_uniform(keys[0], (d_model, vf_dim, 1)),
                       b=jnp.zeros((d_model,), jnp.float32),
                       gamma=jnp.ones((d_model,), jnp.float32),
                       beta=jnp.zeros((d_model,), jnp.float32)))
    for l in range(1, num_feature_levels):
        params.append(dict(w=xavier_uniform(keys[l], (d_model, in_channels, 3)),
                           b=jnp.zeros((d_model,), jnp.float32),
                           gamma=jnp.ones((d_model,), jnp.float32),
                           beta=jnp.zeros((d_model,), jnp.float32)))
        in_channels = d_model
    return params


def base_encoder_forward(vf, mask, duration, params, num_feature_levels, d_model):
    """Pallas path.  vf: (B, T, vf_dim); mask: (B, T) bool (True = padding);
    duration: (B,).  Returns srcs/masks/poses with the PyTorch module's shapes
    ((B, d_model, T_l) for srcs/poses)."""
    del duration  # stored in NestedTensor in the original but unused by this forward
    cp = _round_up(d_model, 128)                 # lane-dense channel padding
    B, T, vf_dim = vf.shape
    srcs, masks, poses = [], [], []

    # level 0: Conv1d(k=1) + GN on the raw frame features (in-kernel f32->bf16 cast)
    y0 = conv1x1_gn_pallas(vf, params[0]["w"], params[0]["b"],
                           params[0]["gamma"], params[0]["beta"],
                           cp=cp, d_model=d_model)
    srcs.append(jnp.transpose(y0.reshape(B, T, d_model), (0, 2, 1)))
    masks.append(mask)
    poses.append(pos_embed_sine(mask, d_model))

    # level 1 consumes the raw features (as in PyTorch): pack frame pairs once (bf16),
    # with per-batch packed rows rounded to 8 so all later slices/stores are aligned.
    n = (T + 1) // 2
    np1 = _round_up(n + 1, 8)
    xp = jnp.pad(vf.astype(jnp.bfloat16), ((0, 0), (0, 2 * np1 - T), (0, 0)))
    xp = xp.reshape(B * np1, 2 * vf_dim)

    for l in range(1, num_feature_levels):
        n_next = (n + 1) // 2
        np1_next = _round_up(n_next + 1, 8)
        tpad = 2 * np1_next
        src2d, carry2d = conv3s2_gn_pallas(
            xp, params[l]["w"], params[l]["b"], params[l]["gamma"], params[l]["beta"],
            batch=B, n=n, np1=np1, tpad=tpad, cp=cp, d_model=d_model)
        srcs.append(jnp.transpose(src2d.reshape(B, n, d_model), (0, 2, 1)))
        m = interp_mask_nearest(mask, n)
        masks.append(m)
        poses.append(pos_embed_sine(m, d_model).astype(src2d.dtype))
        # bf16 carry is already in the next level's packed layout: free reshape only.
        xp = carry2d.reshape(B * np1_next, 2 * cp)
        n, np1 = n_next, np1_next
    return srcs, masks, poses


def base_encoder_forward_ref(vf, mask, duration, params, num_feature_levels, d_model):
    del duration
    vfT = jnp.transpose(vf, (0, 2, 1))
    srcs = [conv1d_gn_ref(vfT, params[0]["w"], params[0]["b"],
                          params[0]["gamma"], params[0]["beta"], stride=1, padding=0)]
    masks = [mask]
    poses = [pos_embed_sine(mask, d_model)]
    for l in range(1, num_feature_levels):
        inp = vfT if l == 1 else srcs[-1]
        src = conv1d_gn_ref(inp, params[l]["w"], params[l]["b"],
                            params[l]["gamma"], params[l]["beta"], stride=2, padding=1)
        m = interp_mask_nearest(mask, src.shape[-1])
        srcs.append(src)
        masks.append(m)
        poses.append(pos_embed_sine(m, d_model).astype(src.dtype))
    return srcs, masks, poses


# ----------------------------------------------------------------------------
if __name__ == "__main__":
    B, T, VF_DIM, D_MODEL, L = 2, 16, 40, 64, 4   # d_model must be divisible by 32

    key = jax.random.PRNGKey(0)
    k_vf, k_params = jax.random.split(key)
    vf = jax.random.normal(k_vf, (B, T, VF_DIM), jnp.float32)
    mask = jnp.zeros((B, T), jnp.bool_).at[1, 12:].set(True)   # True = padded
    duration = jnp.array([T, 12], jnp.int32)

    params = init_params(k_params, L, VF_DIM, D_MODEL)

    srcs, masks, poses = base_encoder_forward(vf, mask, duration, params, L, D_MODEL)
    srcs_ref, masks_ref, poses_ref = base_encoder_forward_ref(
        vf, mask, duration, params, L, D_MODEL)

    for s in srcs + poses:
        jax.block_until_ready(s)

    expected_len = T
    for l in range(L):
        assert srcs[l].shape == (B, D_MODEL, expected_len), srcs[l].shape
        assert masks[l].shape == (B, expected_len), masks[l].shape
        assert poses[l].shape == (B, D_MODEL, expected_len), poses[l].shape
        # bf16 operand rounding differs slightly between the XLA conv reference and the
        # packed two-matmul kernel -> bf16-grade tolerance on the (unit-scale) GN output.
        assert jnp.allclose(srcs[l], srcs_ref[l], atol=1e-2, rtol=1e-2), \
            f"src level {l} mismatch"
        assert jnp.array_equal(masks[l], masks_ref[l]), f"mask level {l} mismatch"
        assert jnp.allclose(poses[l], poses_ref[l], atol=1e-4, rtol=1e-4), \
            f"pos level {l} mismatch"
        expected_len = (expected_len + 1) // 2   # k=3, s=2, p=1 halves the length

    print("KERNEL_OK")
</pallas_src>

<mosaic_0001>
module attributes {stable_mosaic.version = 11 : i64} {
  func.func @conv1x1_gn_kernel(%arg0: i32, %arg1: memref<32x40xf32, #tpu.memory_space<vmem>>, %arg2: memref<40x128xbf16, #tpu.memory_space<vmem>>, %arg3: memref<1x128xf32, #tpu.memory_space<vmem>>, %arg4: memref<1x128xf32, #tpu.memory_space<vmem>>, %arg5: memref<1x128xf32, #tpu.memory_space<vmem>>, %arg6: memref<128x128xf32, #tpu.memory_space<vmem>>, %arg7: memref<32x64xf32, #tpu.memory_space<vmem>>) attributes {dimension_semantics = [#tpu.dimension_semantics<parallel>], iteration_bounds = array<i64: 1>, scalar_prefetch = 0 : i64, scratch_operands = 0 : i64, tpu.core_type = #tpu.core_type<tc>, window_params = [{transform_indices = @transform_0, window_bounds = array<i64: 32, 40>}, {pipeline_mode = #tpu.pipeline_mode<synchronous>, transform_indices = @transform_1, window_bounds = array<i64: 40, 128>}, {pipeline_mode = #tpu.pipeline_mode<synchronous>, transform_indices = @transform_2, window_bounds = array<i64: 1, 128>}, {pipeline_mode = #tpu.pipeline_mode<synchronous>, transform_indices = @transform_3, window_bounds = array<i64: 1, 128>}, {pipeline_mode = #tpu.pipeline_mode<synchronous>, transform_indices = @transform_4, window_bounds = array<i64: 1, 128>}, {pipeline_mode = #tpu.pipeline_mode<synchronous>, transform_indices = @transform_5, window_bounds = array<i64: 128, 128>}, {transform_indices = @transform_6, window_bounds = array<i64: 32, 64>}]} {
    %c0 = arith.constant 0 : index
    %c0_0 = arith.constant 0 : index
    %0 = vector.load %arg1[%c0, %c0_0] : memref<32x40xf32, #tpu.memory_space<vmem>>, vector<32x40xf32>
    %1 = arith.truncf %0 : vector<32x40xf32> to vector<32x40xbf16>
    %c0_1 = arith.constant 0 : index
    %c0_2 = arith.constant 0 : index
    %2 = vector.load %arg2[%c0_1, %c0_2] : memref<40x128xbf16, #tpu.memory_space<vmem>>, vector<40x128xbf16>
    %cst = arith.constant dense<0.000000e+00> : vector<32x128xf32>
    %3 = tpu.matmul %1, %2, %cst {dimension_numbers = #tpu.dot_dimension_numbers<[1], [0], [0], [1], [0, 0, 1, 1], [], []>} : vector<32x40xbf16>, vector<40x128xbf16>, vector<32x128xf32> -> vector<32x128xf32>
    %c0_3 = arith.constant 0 : index
    %c0_4 = arith.constant 0 : index
    %4 = vector.load %arg3[%c0_3, %c0_4] : memref<1x128xf32, #tpu.memory_space<vmem>>, vector<1x128xf32>
    %5 = vector.broadcast %4 : vector<1x128xf32> to vector<32x128xf32>
    %6 = arith.addf %3, %5 : vector<32x128xf32>
    %c0_5 = arith.constant 0 : index
    %c0_6 = arith.constant 0 : index
    %7 = vector.load %arg6[%c0_5, %c0_6] : memref<128x128xf32, #tpu.memory_space<vmem>>, vector<128x128xf32>
    %8 = vector.extract_strided_slice %6 {offsets = [0, 0], sizes = [16, 128], strides = [1, 1]} : vector<32x128xf32> to vector<16x128xf32>
    %cst_7 = arith.constant dense<0.000000e+00> : vector<128xf32>
    %9 = vector.multi_reduction <add>, %8, %cst_7 [0] : vector<16x128xf32> to vector<128xf32>
    %10 = vector.shape_cast %9 : vector<128xf32> to vector<1x128xf32>
    %11 = arith.mulf %8, %8 : vector<16x128xf32>
    %cst_8 = arith.constant dense<0.000000e+00> : vector<128xf32>
    %12 = vector.multi_reduction <add>, %11, %cst_8 [0] : vector<16x128xf32> to vector<128xf32>
    %13 = vector.shape_cast %12 : vector<128xf32> to vector<1x128xf32>
    %14 = vector.extract_strided_slice %6 {offsets = [16, 0], sizes = [16, 128], strides = [1, 1]} : vector<32x128xf32> to vector<16x128xf32>
    %cst_9 = arith.constant dense<0.000000e+00> : vector<128xf32>
    %15 = vector.multi_reduction <add>, %14, %cst_9 [0] : vector<16x128xf32> to vector<128xf32>
    %16 = vector.shape_cast %15 : vector<128xf32> to vector<1x128xf32>
    %17 = arith.mulf %14, %14 : vector<16x128xf32>
    %cst_10 = arith.constant dense<0.000000e+00> : vector<128xf32>
    %18 = vector.multi_reduction <add>, %17, %cst_10 [0] : vector<16x128xf32> to vector<128xf32>
    %19 = vector.shape_cast %18 : vector<128xf32> to vector<1x128xf32>
    %20 = tpu.concatenate %10, %16, %13, %19 in 0 : vector<1x128xf32>, vector<1x128xf32>, vector<1x128xf32>, vector<1x128xf32> -> vector<4x128xf32>
    %cst_11 = arith.constant dense<0.000000e+00> : vector<4x128xf32>
    %21 = tpu.matmul %20, %7, %cst_11 {dimension_numbers = #tpu.dot_dimension_numbers<[1], [0], [0], [1], [0, 0, 1, 1], [], []>} : vector<4x128xf32>, vector<128x128xf32>, vector<4x128xf32> -> vector<4x128xf32>
    %cst_12 = arith.constant 3.125000e-02 : f32
    %22 = vector.broadcast %cst_12 : f32 to vector<4x128xf32>
    %23 = arith.mulf %21, %22 : vector<4x128xf32>
    %c0_13 = arith.constant 0 : index
    %c0_14 = arith.constant 0 : index
    %24 = vector.load %arg4[%c0_13, %c0_14] : memref<1x128xf32, #tpu.memory_space<vmem>>, vector<1x128xf32>
    %c0_15 = arith.constant 0 : index
    %c0_16 = arith.constant 0 : index
    %25 = vector.load %arg5[%c0_15, %c0_16] : memref<1x128xf32, #tpu.memory_space<vmem>>, vector<1x128xf32>
    %26 = vector.extract_strided_slice %6 {offsets = [0, 0], sizes = [16, 128], strides = [1, 1]} : vector<32x128xf32> to vector<16x128xf32>
    %27 = vector.extract_strided_slice %23 {offsets = [0, 0], sizes = [1, 128], strides = [1, 1]} : vector<4x128xf32> to vector<1x128xf32>
    %28 = vector.extract_strided_slice %23 {offsets = [2, 0], sizes = [1, 128], strides = [1, 1]} : vector<4x128xf32> to vector<1x128xf32>
    %29 = arith.mulf %27, %27 : vector<1x128xf32>
    %30 = arith.subf %28, %29 : vector<1x128xf32>
    %cst_17 = arith.constant 0.000000e+00 : f32
    %31 = vector.broadcast %cst_17 : f32 to vector<1x128xf32>
    %32 = arith.maximumf %30, %31 : vector<1x128xf32>
    %cst_18 = arith.constant 9.99999974E-6 : f32
    %33 = vector.broadcast %cst_18 : f32 to vector<1x128xf32>
    %34 = arith.addf %32, %33 : vector<1x128xf32>
    %35 = math.rsqrt %34 : vector<1x128xf32>
    %36 = vector.broadcast %27 : vector<1x128xf32> to vector<16x128xf32>
    %37 = arith.subf %26, %36 : vector<16x128xf32>
    %38 = vector.broadcast %35 : vector<1x128xf32> to vector<16x128xf32>
    %39 = arith.mulf %37, %38 : vector<16x128xf32>
    %40 = vector.broadcast %24 : vector<1x128xf32> to vector<16x128xf32>
    %41 = arith.mulf %39, %40 : vector<16x128xf32>
    %42 = vector.broadcast %25 : vector<1x128xf32> to vector<16x128xf32>
    %43 = arith.addf %41, %42 : vector<16x128xf32>
    %44 = vector.extract_strided_slice %43 {offsets = [0, 0], sizes = [16, 64], strides = [1, 1]} : vector<16x128xf32> to vector<16x64xf32>
    %c0_19 = arith.constant 0 : index
    %c0_20 = arith.constant 0 : index
    %45 = vector.load %arg7[%c0_19, %c0_20] : memref<32x64xf32, #tpu.memory_space<vmem>>, vector<16x64xf32>
    tpu.vector_store %arg7[%c0_19, %c0_20], %44 {strides = array<i32>} : memref<32x64xf32, #tpu.memory_space<vmem>>, vector<16x64xf32>,
    %46 = vector.extract_strided_slice %6 {offsets = [16, 0], sizes = [16, 128], strides = [1, 1]} : vector<32x128xf32> to vector<16x128xf32>
    %47 = vector.extract_strided_slice %23 {offsets = [1, 0], sizes = [1, 128], strides = [1, 1]} : vector<4x128xf32> to vector<1x128xf32>
    %48 = vector.extract_strided_slice %23 {offsets = [3, 0], sizes = [1, 128], strides = [1, 1]} : vector<4x128xf32> to vector<1x128xf32>
    %49 = arith.mulf %47, %47 : vector<1x128xf32>
    %50 = arith.subf %48, %49 : vector<1x128xf32>
    %cst_21 = arith.constant 0.000000e+00 : f32
    %51 = vector.broadcast %cst_21 : f32 to vector<1x128xf32>
    %52 = arith.maximumf %50, %51 : vector<1x128xf32>
    %cst_22 = arith.constant 9.99999974E-6 : f32
    %53 = vector.broadcast %cst_22 : f32 to vector<1x128xf32>
    %54 = arith.addf %52, %53 : vector<1x128xf32>
    %55 = math.rsqrt %54 : vector<1x128xf32>
    %56 = vector.broadcast %47 : vector<1x128xf32> to vector<16x128xf32>
    %57 = arith.subf %46, %56 : vector<16x128xf32>
    %58 = vector.broadcast %55 : vector<1x128xf32> to vector<16x128xf32>
    %59 = arith.mulf %57, %58 : vector<16x128xf32>
    %60 = vector.broadcast %24 : vector<1x128xf32> to vector<16x128xf32>
    %61 = arith.mulf %59, %60 : vector<16x128xf32>
    %62 = vector.broadcast %25 : vector<1x128xf32> to vector<16x128xf32>
    %63 = arith.addf %61, %62 : vector<16x128xf32>
    %64 = vector.extract_strided_slice %63 {offsets = [0, 0], sizes = [16, 64], strides = [1, 1]} : vector<16x128xf32> to vector<16x64xf32>
    %c16 = arith.constant 16 : index
    %c0_23 = arith.constant 0 : index
    %65 = vector.load %arg7[%c16, %c0_23] : memref<32x64xf32, #tpu.memory_space<vmem>>, vector<16x64xf32>
    tpu.vector_store %arg7[%c16, %c0_23], %64 {strides = array<i32>} : memref<32x64xf32, #tpu.memory_space<vmem>>, vector<16x64xf32>,
    return
  }
  func.func @transform_0(%arg0: i32) -> (i32, i32) {
    %c0_i32 = arith.constant 0 : i32
    %c0_i32_0 = arith.constant 0 : i32
    return %arg0, %c0_i32 : i32, i32
  }
  func.func @transform_1(%arg0: i32) -> (i32, i32) {
    %c0_i32 = arith.constant 0 : i32
    %c0_i32_0 = arith.constant 0 : i32
    %c0_i32_1 = arith.constant 0 : i32
    return %c0_i32, %c0_i32_0 : i32, i32
  }
  func.func @transform_2(%arg0: i32) -> (i32, i32) {
    %c0_i32 = arith.constant 0 : i32
    %c0_i32_0 = arith.constant 0 : i32
    %c0_i32_1 = arith.constant 0 : i32
    return %c0_i32, %c0_i32_0 : i32, i32
  }
  func.func @transform_3(%arg0: i32) -> (i32, i32) {
    %c0_i32 = arith.constant 0 : i32
    %c0_i32_0 = arith.constant 0 : i32
    %c0_i32_1 = arith.constant 0 : i32
    return %c0_i32, %c0_i32_0 : i32, i32
  }
  func.func @transform_4(%arg0: i32) -> (i32, i32) {
    %c0_i32 = arith.constant 0 : i32
    %c0_i32_0 = arith.constant 0 : i32
    %c0_i32_1 = arith.constant 0 : i32
    return %c0_i32, %c0_i32_0 : i32, i32
  }
  func.func @transform_5(%arg0: i32) -> (i32, i32) {
    %c0_i32 = arith.constant 0 : i32
    %c0_i32_0 = arith.constant 0 : i32
    %c0_i32_1 = arith.constant 0 : i32
    return %c0_i32, %c0_i32_0 : i32, i32
  }
  func.func @transform_6(%arg0: i32) -> (i32, i32) {
    %c0_i32 = arith.constant 0 : i32
    %c0_i32_0 = arith.constant 0 : i32
    return %arg0, %c0_i32 : i32, i32
  }
}

</mosaic_0001>

<llo_original>
// kernel: tpu_custom_call.1
$region0: #{tpu_custom_call.1}
  #allocation0 [shape = 'u32[]', space=smem, size = 0x4, offset = 0x4, fixed_abs, tag = 'smem constant byte address 0x4 - core index']
  #allocation1 [shape = 'u32[144,128]{1,0:T(1,128)}', space=vmem, size = 0x12000, scoped, tag = 'internal scratch']
  %s0 = inlined_call_operand.hbm [shape: f32[32,40], index: 0, kind: input, shape index: {}]
  %s1 = inlined_call_operand.hbm [shape: bf16[40,128], index: 1, kind: input, shape index: {}]
  %s2 = inlined_call_operand.vmem [shape: f32[1,128], index: 2, kind: input, shape index: {}]
  %s3 = inlined_call_operand.vmem [shape: f32[1,128], index: 3, kind: input, shape index: {}]
  %s4 = inlined_call_operand.vmem [shape: f32[1,128], index: 4, kind: input, shape index: {}]
  %s5 = inlined_call_operand.hbm [shape: f32[128,128], index: 5, kind: input, shape index: {}]
  %s6 = inlined_call_operand.hbm [shape: f32[32,64], index: 6, kind: output, shape index: {}]
  %s7 = sld [smem:[#allocation0]]
  $region46: #{tpu_custom_call.1} parent=0
    _
  %s9 = ssub.s32 1, %s7
  %s10 = scalar_select 0, %s9, %s7
  $region1: #{tpu_custom_call.1} parent=0
    #allocation2 [shape = 'u8[16384]{0}', space=vmem, size = 0x4000, scoped, tag = 'input window, operand 0, single buffered']
    #allocation3 [shape = 's32[1]{0}', space=sflag, size = 0x4, scoped, tag = 'scoped memory for tpu_custom_call.1']
    #allocation4 [shape = 's32[1]{0}', space=sflag, size = 0x4, scoped, tag = 'scoped memory for tpu_custom_call.1']
    #allocation5 [shape = 'u8[10240]{0}', space=vmem, size = 0x2800, scoped, tag = 'input window, operand 1, single buffered']
    #allocation6 [shape = 's32[1]{0}', space=sflag, size = 0x4, scoped, tag = 'scoped memory for tpu_custom_call.1']
    #allocation7 [shape = 'u8[65536]{0}', space=vmem, size = 0x10000, scoped, tag = 'input window, operand 5, single buffered']
    #allocation8 [shape = 'u8[16384]{0}', space=vmem, size = 0x4000, scoped, tag = 'output window, operand 0, single buffered']
    %11 = vsyncpa [#allocation3], 0
    %12 = vsyncpa [#allocation6], 0
    %13 = vsyncpa [#allocation4], 0
    // Predicated region
    $region2: #{tpu_custom_call.1} parent=1 // pred_check
      _
    $region3: #{tpu_custom_call.1} parent=1 // pred_check_branch
      %15 = sbr.rel (0) target = $region5
    $region4: #{tpu_custom_call.1} parent=1 // pred_region
      %s17 = ssub.s32 512, 512
      %18 = vsyncadd [#allocation3], %s17
      %s19 = sshll.u32 [#allocation2], 4
      %s20 = int_to_ptr.vmem [resolvable:$true] %s19
      %25 = dma.hbm_to_vmem [thread:$0]  %s0, 512, %s20, [#allocation3], 128, 128, 8
    $region5: #{tpu_custom_call.1} parent=1 // pred_fallthru
      _
    // Predicated region
    $region6: #{tpu_custom_call.1} parent=1 // pred_check
      _
    $region7: #{tpu_custom_call.1} parent=1 // pred_check_branch
      %27 = sbr.rel (0) target = $region9
    $region8: #{tpu_custom_call.1} parent=1 // pred_region
      %s29 = ssub.s32 320, 320
      %30 = vsyncadd [#allocation6], %s29
      %s31 = sshll.u32 [#allocation5], 4
      %s32 = int_to_ptr.vmem [resolvable:$true] %s31
      %37 = dma.hbm_to_vmem [thread:$0]  %s1, 320, %s32, [#allocation6], 64, 64, 4
    $region9: #{tpu_custom_call.1} parent=1 // pred_fallthru
      _
    // Predicated region
    $region10: #{tpu_custom_call.1} parent=1 // pred_check
      _
    $region11: #{tpu_custom_call.1} parent=1 // pred_check_branch
      %39 = sbr.rel (0) target = $region13
    $region12: #{tpu_custom_call.1} parent=1 // pred_region
      _
    $region13: #{tpu_custom_call.1} parent=1 // pred_fallthru
      _
    // Predicated region
    $region14: #{tpu_custom_call.1} parent=1 // pred_check
      _
    $region15: #{tpu_custom_call.1} parent=1 // pred_check_branch
      %41 = sbr.rel (0) target = $region17
    $region16: #{tpu_custom_call.1} parent=1 // pred_region
      _
    $region17: #{tpu_custom_call.1} parent=1 // pred_fallthru
      _
    // Predicated region
    $region18: #{tpu_custom_call.1} parent=1 // pred_check
      _
    $region19: #{tpu_custom_call.1} parent=1 // pred_check_branch
      %43 = sbr.rel (0) target = $region21
    $region20: #{tpu_custom_call.1} parent=1 // pred_region
      _
    $region21: #{tpu_custom_call.1} parent=1 // pred_fallthru
      _
    // Predicated region
    $region22: #{tpu_custom_call.1} parent=1 // pred_check
      _
    $region23: #{tpu_custom_call.1} parent=1 // pred_check_branch
      %45 = sbr.rel (0) target = $region25
    $region24: #{tpu_custom_call.1} parent=1 // pred_region
      %s47 = ssub.s32 2048, 2048
      %48 = vsyncadd [#allocation6], %s47
      %s49 = sshll.u32 [#allocation7], 4
      %s50 = int_to_ptr.vmem [resolvable:$true] %s49
      %55 = dma.hbm_to_vmem [thread:$0]  %s5, 2048, %s50, [#allocation6], 128, 128, 8
    $region25: #{tpu_custom_call.1} parent=1 // pred_fallthru
      _
    // Predicated region
    $region26: #{tpu_custom_call.1} parent=1 // pred_check
      _
    $region27: #{tpu_custom_call.1} parent=1 // pred_check_branch
      %57 = sbr.rel (0) target = $region29
    $region28: #{tpu_custom_call.1} parent=1 // pred_region
      %58 = dma.done [#allocation3], 512
    $region29: #{tpu_custom_call.1} parent=1 // pred_fallthru
      _
    // Predicated region
    $region30: #{tpu_custom_call.1} parent=1 // pred_check
      _
    $region31: #{tpu_custom_call.1} parent=1 // pred_check_branch
      %60 = sbr.rel (0) target = $region33
    $region32: #{tpu_custom_call.1} parent=1 // pred_region
      %61 = dma.done [#allocation6], 320
    $region33: #{tpu_custom_call.1} parent=1 // pred_fallthru
      _
    // Predicated region
    $region34: #{tpu_custom_call.1} parent=1 // pred_check
      _
    $region35: #{tpu_custom_call.1} parent=1 // pred_check_branch
      %63 = sbr.rel (0) target = $region37
    $region36: #{tpu_custom_call.1} parent=1 // pred_region
      %64 = dma.done [#allocation6], 2048
    $region37: #{tpu_custom_call.1} parent=1 // pred_fallthru
      _
    %v66 = vld [vmem:[#allocation2] sm:$0xff]
    %v67 = vld [vmem:[#allocation2 + $0x8] sm:$0xff]
    %v68 = vld [vmem:[#allocation2 + $0x10] sm:$0xff]
    %v69 = vld [vmem:[#allocation2 + $0x18] sm:$0xff]
    %v70 = vpack.c.bf16 %v67, %v66
    %v71 = vpack.c.bf16 %v69, %v68
    %v72 = vld [vmem:[#allocation5] sm:$0xf]
    %v73 = vld [vmem:[#allocation5 + $0x4] sm:$0xf]
    %v74 = vld [vmem:[#allocation5 + $0x8] sm:$0xf]
    %v75 = vld [vmem:[#allocation5 + $0xc] sm:$0xf]
    %v76 = vld [vmem:[#allocation5 + $0x10] sm:$0xf]
    %v77 = vld [vmem:[%s2] sm:$0x1]
    %v79 = vlaneseq
    %v80 = vshrl.u32 %v79, 7
    %v81 = vsub.s32 0, %v80
    %v82 = vrot.slane %v77, %v81
    %v89 = vunpack.c.l.b16 %v72
    %v90 = vunpack.c.l.b16 %v73
    %v91 = vunpack.c.l.b16 %v74
    %v92 = vunpack.c.l.b16 %v75
    %v93 = vunpack.c.l.b16 %v76
    %v94 = vpack.c.b16 %v90, %v89
    %v95 = vpack.c.b16 %v92, %v91
    %v96 = vpack.c.b16 %v93, %v93
    %vm99 = vcmask 326656
    %v101 = vsel %vm99, %v70, 0
    %v104 = vsel %vm99, %v71, 0
    %vm106 = vcmask 1043456
    %v108 = vsel %vm106, %v96, 0
    %110 = vmatprep.subr.bf16.mxu0 0
    %111 = vmatpush1.bf16.msra.mxu0 %v94
    %112 = vmatprep.subr.bf16.mxu0 0
    %113 = vmatpush1.bf16.msra.mxu0 %v95
    %114 = vmatprep.subr.bf16.mxu0 0
    %115 = vmatpush1.bf16.msra.mxu0 %v108
    %116 = vmatprep.subr.bf16.mxu0 0
    %117 = vmatpush1.bf16.msra.mxu0 0
    %118 = vmatprep.subr.bf16.mxu0 0
    %119 = vmatpush1.bf16.msra.mxu0 0
    %120 = vmatprep.subr.bf16.mxu0 0
    %121 = vmatpush1.bf16.msra.mxu0 0
    %122 = vmatprep.subr.bf16.mxu0 0
    %123 = vmatpush1.bf16.msra.mxu0 0
    %124 = vmatprep.subr.bf16.mxu0 0
    %125 = vmatpush1.bf16.msra.mxu0 0
    %126 = vmatprep.subr.bf16.mxu0 0
    %127 = vmatpush1.bf16.msra.mxu0 0
    %128 = vmatprep.subr.bf16.mxu0 0
    %129 = vmatpush1.bf16.msra.mxu0 0
    %130 = vmatprep.subr.bf16.mxu0 0
    %131 = vmatpush1.bf16.msra.mxu0 0
    %132 = vmatprep.subr.bf16.mxu0 0
    %133 = vmatpush1.bf16.msra.mxu0 0
    %134 = vmatprep.subr.bf16.mxu0 0
    %135 = vmatpush1.bf16.msra.mxu0 0
    %136 = vmatprep.subr.bf16.mxu0 0
    %137 = vmatpush1.bf16.msra.mxu0 0
    %138 = vmatprep.subr.bf16.mxu0 0
    %139 = vmatpush1.bf16.msra.mxu0 0
    %140 = vmatprep.subr.bf16.mxu0 0
    %141 = vmatpush1.bf16.msra.mxu0 0
    %142 = vmatprep.mubr.bf16.mxu0 0
    %143 = vmatmul.mubr.bf16.gmra.mrb[0].mxu0 %v101
    %v144 = vpop.f32.mrb[0].mxu0
    %v145 = vadd.f32 %v82, %v144
    %v146 = vpop.f32.mrb[0].mxu0
    %v147 = vpop.f32.mrb[0].mxu0
    %v148 = vadd.f32 %v82, %v147
    %v149 = vpop.f32.mrb[0].mxu0
    %150 = vmatprep.mubr.bf16.mxu0 0
    %151 = vmatmul.mubr.bf16.gmra.mrb[0].mxu0 %v104
    %v152 = vpop.f32.mrb[0].mxu0
    %v153 = vadd.f32 %v82, %v152
    %v154 = vpop.f32.mrb[0].mxu0
    %v155 = vpop.f32.mrb[0].mxu0
    %v156 = vadd.f32 %v82, %v155
    %v157 = vpop.f32.mrb[0].mxu0
    %158 = vdwg.mxu0
    %v159 = vld [vmem:[#allocation7] sm:$0xff]
    %v160 = vld [vmem:[#allocation7 + $0x8] sm:$0xff]
    %v161 = vld [vmem:[#allocation7 + $0x10] sm:$0xff]
    %v162 = vld [vmem:[#allocation7 + $0x18] sm:$0xff]
    %v163 = vld [vmem:[#allocation7 + $0x20] sm:$0xff]
    %v164 = vld [vmem:[#allocation7 + $0x28] sm:$0xff]
    %v165 = vld [vmem:[#allocation7 + $0x30] sm:$0xff]
    %v166 = vld [vmem:[#allocation7 + $0x38] sm:$0xff]
    %v167 = vld [vmem:[#allocation7 + $0x40] sm:$0xff]
    %v168 = vld [vmem:[#allocation7 + $0x48] sm:$0xff]
    %v169 = vld [vmem:[#allocation7 + $0x50] sm:$0xff]
    %v170 = vld [vmem:[#allocation7 + $0x58] sm:$0xff]
    %v171 = vld [vmem:[#allocation7 + $0x60] sm:$0xff]
    %v172 = vld [vmem:[#allocation7 + $0x68] sm:$0xff]
    %v173 = vld [vmem:[#allocation7 + $0x70] sm:$0xff]
    %v174 = vld [vmem:[#allocation7 + $0x78] sm:$0xff]
    %v175 = vadd.f32 %v145, %v148
    %v176 = vrot.slane %v175, 4
    %v177 = vadd.f32 %v175, %v176
    %v178 = vrot.slane %v177, 2
    %v179 = vadd.f32 %v177, %v178
    %v180 = vrot.slane %v179, 1
    %v181 = vadd.f32 %v179, %v180
    %v182 = vmul.f32 %v145, %v145
    %v183 = vmul.f32 %v148, %v148
    %v184 = vadd.f32 %v182, %v183
    %v185 = vrot.slane %v184, 4
    %v186 = vadd.f32 %v184, %v185
    %v187 = vrot.slane %v186, 2
    %v188 = vadd.f32 %v186, %v187
    %v189 = vrot.slane %v188, 1
    %v190 = vadd.f32 %v188, %v189
    %v191 = vadd.f32 %v153, %v156
    %v192 = vrot.slane %v191, 4
    %v193 = vadd.f32 %v191, %v192
    %v194 = vrot.slane %v193, 2
    %v195 = vadd.f32 %v193, %v194
    %v196 = vrot.slane %v195, 1
    %v197 = vadd.f32 %v195, %v196
    %v198 = vmul.f32 %v153, %v153
    %v199 = vmul.f32 %v156, %v156
    %v200 = vadd.f32 %v198, %v199
    %v201 = vrot.slane %v200, 4
    %v202 = vadd.f32 %v200, %v201
    %v203 = vrot.slane %v202, 2
    %v204 = vadd.f32 %v202, %v203
    %v205 = vrot.slane %v204, 1
    %v206 = vadd.f32 %v204, %v205
    %vm207 = vcmask 1040384
    %v208 = vsel %vm207, %v181, %v197
    %vm209 = vcmask 1041408
    %v210 = vsel %vm209, %v208, %v190
    %vm211 = vcmask 1042432
    %v212 = vsel %vm211, %v210, %v206
    %213 = vmatprep.subr.mxu0 0.0
    %214 = vmatpush1.msra.mxu0 %v159
    %215 = vmatprep.subr.mxu0 0.0
    %216 = vmatpush1.msra.mxu0 %v160
    %217 = vmatprep.subr.mxu0 0.0
    %218 = vmatpush1.msra.mxu0 %v161
    %219 = vmatprep.subr.mxu0 0.0
    %220 = vmatpush1.msra.mxu0 %v162
    %221 = vmatprep.subr.mxu0 0.0
    %222 = vmatpush1.msra.mxu0 %v163
    %223 = vmatprep.subr.mxu0 0.0
    %224 = vmatpush1.msra.mxu0 %v164
    %225 = vmatprep.subr.mxu0 0.0
    %226 = vmatpush1.msra.mxu0 %v165
    %227 = vmatprep.subr.mxu0 0.0
    %228 = vmatpush1.msra.mxu0 %v166
    %229 = vmatprep.subr.mxu0 0.0
    %230 = vmatpush1.msra.mxu0 %v167
    %231 = vmatprep.subr.mxu0 0.0
    %232 = vmatpush1.msra.mxu0 %v168
    %233 = vmatprep.subr.mxu0 0.0
    %234 = vmatpush1.msra.mxu0 %v169
    %235 = vmatprep.subr.mxu0 0.0
    %236 = vmatpush1.msra.mxu0 %v170
    %237 = vmatprep.subr.mxu0 0.0
    %238 = vmatpush1.msra.mxu0 %v171
    %239 = vmatprep.subr.mxu0 0.0
    %240 = vmatpush1.msra.mxu0 %v172
    %241 = vmatprep.subr.mxu0 0.0
    %242 = vmatpush1.msra.mxu0 %v173
    %243 = vmatprep.subr.mxu0 0.0
    %244 = vmatpush1.msra.mxu0 %v174
    %245 = vmatprep.subr.mxu0 0.0
    %246 = vmatpush1.msra.mxu0 0.0
    %247 = vmatprep.subr.mxu0 0.0
    %248 = vmatpush1.msra.mxu0 0.0
    %249 = vmatprep.subr.mxu0 0.0
    %250 = vmatpush1.msra.mxu0 0.0
    %251 = vmatprep.subr.mxu0 0.0
    %252 = vmatpush1.msra.mxu0 0.0
    %253 = vmatprep.subr.mxu0 0.0
    %254 = vmatpush1.msra.mxu0 0.0
    %255 = vmatprep.subr.mxu0 0.0
    %256 = vmatpush1.msra.mxu0 0.0
    %257 = vmatprep.subr.mxu0 0.0
    %258 = vmatpush1.msra.mxu0 0.0
    %259 = vmatprep.subr.mxu0 0.0
    %260 = vmatpush1.msra.mxu0 0.0
    %261 = vmatprep.subr.mxu0 0.0
    %262 = vmatpush1.msra.mxu0 0.0
    %263 = vmatprep.subr.mxu0 0.0
    %264 = vmatpush1.msra.mxu0 0.0
    %265 = vmatprep.subr.mxu0 0.0
    %266 = vmatpush1.msra.mxu0 0.0
    %267 = vmatprep.subr.mxu0 0.0
    %268 = vmatpush1.msra.mxu0 0.0
    %269 = vmatprep.subr.mxu0 0.0
    %270 = vmatpush1.msra.mxu0 0.0
    %271 = vmatprep.subr.mxu0 0.0
    %272 = vmatpush1.msra.mxu0 0.0
    %273 = vmatprep.subr.mxu0 0.0
    %274 = vmatpush1.msra.mxu0 0.0
    %275 = vmatprep.subr.mxu0 0.0
    %276 = vmatpush1.msra.mxu0 0.0
    %277 = vmatprep.mubr.f32.mxu0 0.0
    %278 = vmatmul.mubr.f32.gmra.mrb[0].mxu0 %v212
    %v279 = vpop.f32.mrb[0].mxu0
    %v280 = vadd.f32 0.0, %v279
    %v281 = vpop.f32.mrb[0].mxu0
    %282 = vdwg.mxu0
    %v283 = vmul.f32 %v280, 0.03125
    %v284 = vld [vmem:[%s3] sm:$0x1]
    %v285 = vld [vmem:[%s4] sm:$0x1]
    %v286 = vmul.f32 %v283, %v283
    %v288 = vrot.slane %v286, 6
    %v290 = vsub.f32 %v283, %v288
    %v291 = vmax.f32 %v290, 0.0
    %v292 = vadd.f32 %v291, 1e-05
    %v293 = vrsqrt.pop %v292
    %v294 = vlaneseq
    %v295 = vshrl.u32 %v294, 7
    %v296 = vsub.s32 0, %v295
    %v297 = vrot.slane %v283, %v296
    %v298 = vsub.f32 %v145, %v297
    %v299 = vsub.f32 %v148, %v297
    %v300 = vlaneseq
    %v301 = vshrl.u32 %v300, 7
    %v302 = vsub.s32 2, %v301
    %v303 = vrot.slane %v293, %v302
    %v304 = vmul.f32 %v298, %v303
    %v305 = vmul.f32 %v299, %v303
    %v307 = vlaneseq
    %v308 = vshrl.u32 %v307, 7
    %v309 = vsub.s32 0, %v308
    %v310 = vrot.slane %v284, %v309
    %v312 = vmul.f32 %v304, %v310
    %v313 = vmul.f32 %v305, %v310
    %v315 = vlaneseq
    %v316 = vshrl.u32 %v315, 7
    %v317 = vsub.s32 0, %v316
    %v318 = vrot.slane %v285, %v317
    %v320 = vadd.f32 %v312, %v318
    %v321 = vadd.f32 %v313, %v318
    %vm322 = vcmask 523264
    %323 = vst.msk [vmem:[#allocation8] sm:$0xff] %vm322, %v320
    %324 = vst.msk [vmem:[#allocation8 + $0x8] sm:$0xff] %vm322, %v321
    %v325 = vlaneseq
    %v326 = vshrl.u32 %v325, 7
    %v327 = vsub.s32 1, %v326
    %v328 = vrot.slane %v283, %v327
    %v329 = vsub.f32 %v153, %v328
    %v330 = vsub.f32 %v156, %v328
    %v331 = vlaneseq
    %v332 = vshrl.u32 %v331, 7
    %v333 = vsub.s32 3, %v332
    %v334 = vrot.slane %v293, %v333
    %v335 = vmul.f32 %v329, %v334
    %v336 = vmul.f32 %v330, %v334
    %v337 = vmul.f32 %v335, %v310
    %v338 = vmul.f32 %v336, %v310
    %v339 = vadd.f32 %v337, %v318
    %v340 = vadd.f32 %v338, %v318
    %341 = vst.msk [vmem:[#allocation8 + $0x10] sm:$0xff] %vm322, %v339
    %342 = vst.msk [vmem:[#allocation8 + $0x18] sm:$0xff] %vm322, %v340
    // Predicated region
    $region38: #{tpu_custom_call.1} parent=1 // pred_check
      _
    $region39: #{tpu_custom_call.1} parent=1 // pred_check_branch
      %344 = sbr.rel (0) target = $region41
    $region40: #{tpu_custom_call.1} parent=1 // pred_region
      %s346 = ssub.s32 512, 512
      %347 = vsyncadd [#allocation4], %s346
      %s348 = sshll.u32 [#allocation8], 4
      %s349 = int_to_ptr.vmem [resolvable:$true] %s348
      %354 = dma.vmem_to_hbm [thread:$0]  %s349, 512, %s6, [#allocation4], 128, 128, 8
    $region41: #{tpu_custom_call.1} parent=1 // pred_fallthru
      _
    // Predicated region
    $region42: #{tpu_custom_call.1} parent=1 // pred_check
      _
    $region43: #{tpu_custom_call.1} parent=1 // pred_check_branch
      %356 = sbr.rel (0) target = $region45
    $region44: #{tpu_custom_call.1} parent=1 // pred_region
      %357 = dma.done [#allocation4], 512
    $region45: #{tpu_custom_call.1} parent=1 // pred_fallthru
      _
    %358 = vsyncpa [#allocation3], 1
    %359 = vsyncpa [#allocation6], 1
    %360 = vsyncpa [#allocation4], 1

</llo_original>
